<compile_context>
chip_gen: v7x
topology: tpu7x:2x2x1
jax: 0.10.0
libtpu: 0.0.40
codegen_flags: <defaults>
</compile_context>

<pallas_src>
import functools

import numpy as np
import jax
import jax.numpy as jnp
from jax.experimental import pallas as pl
from jax.experimental.pallas import tpu as pltpu


def _round_up(x, m):
    return ((x + m - 1) // m) * m


def _residual_block_kernel(x_ref, m_ref, scale_ref, bias_ref, o_ref, *,
                           num_convs, ksize, padding, block_n, hp, op_dtype):
    """One grid step processes all `block_n` images with batched matmuls.

    x_ref     : (block_n, H, WC)       lane-dense input images (f32)
    m_ref     : (L*K, WC, WC)          packed per-(layer, ky) conv matrices (bf16)
    scale_ref : (L, WC)                folded BN scale, tiled across W (f32)
    bias_ref  : (L, WC)                folded conv-bias + BN shift (f32)
    o_ref     : (block_n, H, WC)       lane-dense output (f32)
    """
    H, WC = x_ref.shape[1], x_ref.shape[2]
    M = block_n * hp

    # Input -> one flat (M, WC) slab; each image gets (hp - H) trailing zero
    # halo rows.  hp is a multiple of 8, so every reshape/slice below is
    # sublane-tile aligned and the stores are full-lane.
    x = x_ref[...].astype(jnp.float32)                                 # (B, H, WC)
    halo = jnp.zeros((block_n, hp - H, WC), jnp.float32)
    cur = jnp.concatenate([x, halo], axis=1).reshape(M, WC)            # zero-haloed slab

    # Rows that hold real pixels (hoisted out of the layer loop).  Re-applied
    # after every layer so the circular rolls always read zeros at image
    # boundaries (i.e. exact 'same' zero-padding in H).
    interior = None
    if num_convs > 1:
        interior = jnp.concatenate(
            [jnp.ones((block_n, H, WC), jnp.float32),
             jnp.zeros((block_n, hp - H, WC), jnp.float32)],
            axis=1).reshape(M, WC)

    for l in range(num_convs):
        scale = scale_ref[l:l + 1, :]                                  # (1, WC)
        bias = bias_ref[l:l + 1, :]
        acc = None
        for ky in range(ksize):
            d = ky - padding                                           # H-direction tap
            if d == 0:
                shifted = cur
            else:
                # shifted[r] = cur[(r + d) mod M]; the zero halo rows make the
                # circular wrap equivalent to zero-padding in H.
                shifted = pltpu.roll(cur, shift=(-d) % M, axis=0)
            p = jnp.dot(shifted.astype(op_dtype), m_ref[l * ksize + ky],
                        preferred_element_type=jnp.float32)            # (M, WC) f32
            acc = p if acc is None else acc + p
        y = acc * scale + bias                                         # conv bias + BN (eval)
        if l != num_convs - 1:
            y = jnp.maximum(y, 0.0)                                    # ReLU (all but last)
            cur = y * interior                                         # keep halos at zero
        else:
            cur = y

    # Residual + final ReLU on interior rows only; halo rows are discarded.
    y3 = cur.reshape(block_n, hp, WC)[:, :H, :]
    o_ref[...] = jnp.maximum(x + y3, 0.0).astype(o_ref.dtype)


def _pack_conv_matrices(weights, *, width, padding, dtype=jnp.bfloat16):
    """(L, K, K, Cin, Cout) HWIO -> (L*K, W*C, W*C), W-padding baked in as zeros.

    NOTE(scaling): the packed matrix is ~(1 - K/W) structural zeros and grows as
    W^2*C^2; fine for W*C ~ 128 lanes, but for much larger W or C switch to an
    im2col-style contraction over K*K*C before it blows past VMEM (v7x has half
    the VMEM of v5e/v6e).
    """
    weights = np.asarray(weights, np.float32)
    num_convs, K, _, C, _ = weights.shape
    WC = width * C
    m = np.zeros((num_convs, K, WC, WC), np.float32)
    for w in range(width):
        for kx in range(K):
            wp = w + kx - padding
            if 0 <= wp < width:
                m[:, :, wp * C:(wp + 1) * C, w * C:(w + 1) * C] = weights[:, :, kx]
    return jnp.asarray(m.reshape(num_convs * K, WC, WC), dtype)


def _pick_block_n(n, h, hp, wc, num_mats, budget_bytes=20 << 20):
    """Largest divisor of n whose per-grid-step VMEM footprint fits the budget.

    Big blocks feed the batched matmul (M = block_n*hp) and amortize per-step
    pipeline overhead; the budget keeps us well under v7x's 32 MiB scoped VMEM.
    """
    def footprint(b):
        io = 2 * 2 * b * h * wc * 4        # double-buffered input + output blocks (f32)
        wgt = 2 * num_mats * wc * wc * 2   # double-buffered packed weights (bf16)
        work = 6 * b * hp * wc * 4         # in-kernel f32 slabs (cur/shifted/acc/x/mask/out)
        return io + wgt + work
    best = 1
    for b in range(1, n + 1):
        if n % b == 0 and footprint(b) <= budget_bytes:
            best = b
    return best


def residual_block2_pallas(x_nchw, weights, scales, biases, *, ksize, padding,
                           block_n=None, op_dtype=jnp.bfloat16):
    """x_nchw: (N, C, H, W) f32. weights: (L, K, K, C, C) HWIO. scales/biases: (L, C)."""
    num_convs = weights.shape[0]
    N, C, H, W = x_nchw.shape
    assert 2 * padding == ksize - 1, "residual block requires 'same' convolutions"
    WC = W * C
    # Per-image slab height: H data rows + >= `padding` zero halo rows, 8-aligned.
    hp = _round_up(H + padding, 8)
    if block_n is None:
        block_n = _pick_block_n(N, H, hp, WC, num_convs * ksize)
    assert N % block_n == 0
    grid_steps = N // block_n

    # NCHW -> NHWC -> lane-dense (N, H, W*C)
    x = jnp.transpose(x_nchw, (0, 2, 3, 1)).reshape(N, H, WC)

    m = _pack_conv_matrices(weights, width=W, padding=padding, dtype=op_dtype)
    scale_lanes = jnp.tile(scales.astype(jnp.float32), (1, W))      # (L, WC)
    bias_lanes = jnp.tile(biases.astype(jnp.float32), (1, W))       # (L, WC)

    kernel = functools.partial(_residual_block_kernel, num_convs=num_convs,
                               ksize=ksize, padding=padding, block_n=block_n,
                               hp=hp, op_dtype=op_dtype)

    flops = 2 * num_convs * ksize * N * hp * WC * WC
    bytes_accessed = (2 * N * H * WC * 4                   # input + output
                      + num_convs * ksize * WC * WC * 2    # packed bf16 weights
                      + 2 * num_convs * WC * 4)            # scale + bias
    cost = pl.CostEstimate(flops=int(flops), transcendentals=0,
                           bytes_accessed=int(bytes_accessed))

    out = pl.pallas_call(
        kernel,
        out_shape=jax.ShapeDtypeStruct((N, H, WC), jnp.float32),
        grid_spec=pltpu.PrefetchScalarGridSpec(
            num_scalar_prefetch=0,
            grid=(grid_steps,),
            in_specs=[
                pl.BlockSpec((block_n, H, WC), lambda n: (n, 0, 0)),
                pl.BlockSpec((num_convs * ksize, WC, WC), lambda n: (0, 0, 0)),
                pl.BlockSpec((num_convs, WC), lambda n: (0, 0)),
                pl.BlockSpec((num_convs, WC), lambda n: (0, 0)),
            ],
            out_specs=pl.BlockSpec((block_n, H, WC), lambda n: (n, 0, 0)),
        ),
        compiler_params=pltpu.CompilerParams(
            dimension_semantics=("parallel",),
            vmem_limit_bytes=32 * 1024 * 1024),
        cost_estimate=cost,
    )(x, m, scale_lanes, bias_lanes)

    return jnp.transpose(out.reshape(N, H, W, C), (0, 3, 1, 2))     # back to NCHW


def _reference_forward(x_nchw, weights, scales, biases, *, ksize, padding):
    """Pure-JAX reference (lax.conv), NHWC internally, for correctness checking."""
    num_convs = weights.shape[0]
    x = jnp.transpose(x_nchw, (0, 2, 3, 1))
    cur = x
    for l in range(num_convs):
        y = jax.lax.conv_general_dilated(
            cur, weights[l], window_strides=(1, 1),
            padding=[(padding, padding), (padding, padding)],
            dimension_numbers=('NHWC', 'HWIO', 'NHWC'))
        y = y * scales[l][None, None, None, :] + biases[l][None, None, None, :]
        if l != num_convs - 1:
            y = jnp.maximum(y, 0.0)
        cur = y
    out = jnp.maximum(x + cur, 0.0)
    return jnp.transpose(out, (0, 3, 1, 2))


def _make_params(key, channels, ksize, num_convs):
    """Deterministic Conv2d + BatchNorm2d params, folded for inference."""
    eps = 1e-5
    w_list, s_list, b_list = [], [], []
    for l in range(num_convs):
        kw, kb, kg, kbeta, km, kv = jax.random.split(jax.random.fold_in(key, l), 6)
        conv_w = 0.1 * jax.random.normal(kw, (ksize, ksize, channels, channels),
                                         jnp.float32)            # HWIO
        conv_b = 0.1 * jax.random.normal(kb, (channels,), jnp.float32)
        gamma = 1.0 + 0.1 * jax.random.normal(kg, (channels,), jnp.float32)
        beta = 0.1 * jax.random.normal(kbeta, (channels,), jnp.float32)
        run_mean = 0.1 * jax.random.normal(km, (channels,), jnp.float32)
        run_var = 1.0 + 0.5 * jax.random.uniform(kv, (channels,), jnp.float32)
        inv_std = 1.0 / jnp.sqrt(run_var + eps)
        scale = gamma * inv_std
        bias = beta + scale * (conv_b - run_mean)
        w_list.append(conv_w)
        s_list.append(scale)
        b_list.append(bias)
    return jnp.stack(w_list), jnp.stack(s_list), jnp.stack(b_list)


if __name__ == "__main__":
    # ResidualBlock2(channels=8, ksize=3, padding=1, num_convs=2); W*C = 128 (lane-dense).
    N, C, H, W = 2, 8, 16, 16
    ksize, padding, num_convs = 3, 1, 2

    key = jax.random.PRNGKey(0)
    k_x, k_p = jax.random.split(key)
    x = jax.random.normal(k_x, (N, C, H, W), jnp.float32)
    weights, scales, biases = _make_params(k_p, C, ksize, num_convs)

    out = residual_block2_pallas(x, weights, scales, biases,
                                 ksize=ksize, padding=padding)
    out = jax.block_until_ready(out)

    ref = _reference_forward(x, weights, scales, biases,
                             ksize=ksize, padding=padding)
    assert out.shape == (N, C, H, W)
    # Tolerance loosened vs the pure-f32 version because matmul operands are bf16
    # (f32 accumulation); a structural bug (e.g. wrong tap/shift) would show O(1) errors.
    assert jnp.allclose(out, ref, atol=3e-2, rtol=3e-2), "mismatch vs JAX reference"

    print("KERNEL_OK")
</pallas_src>

<mosaic_0001>
module attributes {stable_mosaic.version = 11 : i64} {
  func.func @_residual_block_kernel(%arg0: i32, %arg1: memref<2x16x128xf32, #tpu.memory_space<vmem>>, %arg2: memref<6x128x128xbf16, #tpu.memory_space<vmem>>, %arg3: memref<2x128xf32, #tpu.memory_space<vmem>>, %arg4: memref<2x128xf32, #tpu.memory_space<vmem>>, %arg5: memref<2x16x128xf32, #tpu.memory_space<vmem>>) attributes {dimension_semantics = [#tpu.dimension_semantics<parallel>], iteration_bounds = array<i64: 1>, scalar_prefetch = 0 : i64, scratch_operands = 0 : i64, tpu.core_type = #tpu.core_type<tc>, window_params = [{transform_indices = @transform_0, window_bounds = array<i64: 2, 16, 128>}, {pipeline_mode = #tpu.pipeline_mode<synchronous>, transform_indices = @transform_1, window_bounds = array<i64: 6, 128, 128>}, {pipeline_mode = #tpu.pipeline_mode<synchronous>, transform_indices = @transform_2, window_bounds = array<i64: 2, 128>}, {pipeline_mode = #tpu.pipeline_mode<synchronous>, transform_indices = @transform_3, window_bounds = array<i64: 2, 128>}, {transform_indices = @transform_4, window_bounds = array<i64: 2, 16, 128>}]} {
    %c0 = arith.constant 0 : index
    %c0_0 = arith.constant 0 : index
    %c0_1 = arith.constant 0 : index
    %0 = vector.load %arg1[%c0, %c0_0, %c0_1] : memref<2x16x128xf32, #tpu.memory_space<vmem>>, vector<2x16x128xf32>
    %cst = arith.constant 0.000000e+00 : f32
    %1 = vector.broadcast %cst : f32 to vector<2x8x128xf32>
    %2 = tpu.concatenate %0, %1 in 1 : vector<2x16x128xf32>, vector<2x8x128xf32> -> vector<2x24x128xf32>
    %3 = vector.shape_cast %2 : vector<2x24x128xf32> to vector<48x128xf32>
    %cst_2 = arith.constant 1.000000e+00 : f32
    %4 = vector.broadcast %cst_2 : f32 to vector<2x16x128xf32>
    %cst_3 = arith.constant 0.000000e+00 : f32
    %5 = vector.broadcast %cst_3 : f32 to vector<2x8x128xf32>
    %6 = tpu.concatenate %4, %5 in 1 : vector<2x16x128xf32>, vector<2x8x128xf32> -> vector<2x24x128xf32>
    %7 = vector.shape_cast %6 : vector<2x24x128xf32> to vector<48x128xf32>
    %c0_4 = arith.constant 0 : index
    %c0_5 = arith.constant 0 : index
    %8 = vector.load %arg3[%c0_4, %c0_5] : memref<2x128xf32, #tpu.memory_space<vmem>>, vector<1x128xf32>
    %c0_6 = arith.constant 0 : index
    %c0_7 = arith.constant 0 : index
    %9 = vector.load %arg4[%c0_6, %c0_7] : memref<2x128xf32, #tpu.memory_space<vmem>>, vector<1x128xf32>
    %c1_i32 = arith.constant 1 : i32
    %10 = tpu.dynamic_rotate %3 by %c1_i32 dim 0 : vector<48x128xf32>, i32 -> vector<48x128xf32>
    %11 = arith.truncf %10 : vector<48x128xf32> to vector<48x128xbf16>
    %c0_8 = arith.constant 0 : index
    %c0_9 = arith.constant 0 : index
    %c0_10 = arith.constant 0 : index
    %12 = vector.load %arg2[%c0_8, %c0_9, %c0_10] : memref<6x128x128xbf16, #tpu.memory_space<vmem>>, vector<1x128x128xbf16>
    %13 = vector.shape_cast %12 : vector<1x128x128xbf16> to vector<128x128xbf16>
    %cst_11 = arith.constant dense<0.000000e+00> : vector<48x128xf32>
    %14 = tpu.matmul %11, %13, %cst_11 {dimension_numbers = #tpu.dot_dimension_numbers<[1], [0], [0], [1], [0, 0, 1, 1], [], []>} : vector<48x128xbf16>, vector<128x128xbf16>, vector<48x128xf32> -> vector<48x128xf32>
    %15 = arith.truncf %3 : vector<48x128xf32> to vector<48x128xbf16>
    %c1 = arith.constant 1 : index
    %c0_12 = arith.constant 0 : index
    %c0_13 = arith.constant 0 : index
    %16 = vector.load %arg2[%c1, %c0_12, %c0_13] : memref<6x128x128xbf16, #tpu.memory_space<vmem>>, vector<1x128x128xbf16>
    %17 = vector.shape_cast %16 : vector<1x128x128xbf16> to vector<128x128xbf16>
    %cst_14 = arith.constant dense<0.000000e+00> : vector<48x128xf32>
    %18 = tpu.matmul %15, %17, %cst_14 {dimension_numbers = #tpu.dot_dimension_numbers<[1], [0], [0], [1], [0, 0, 1, 1], [], []>} : vector<48x128xbf16>, vector<128x128xbf16>, vector<48x128xf32> -> vector<48x128xf32>
    %19 = arith.addf %14, %18 : vector<48x128xf32>
    %c47_i32 = arith.constant 47 : i32
    %20 = tpu.dynamic_rotate %3 by %c47_i32 dim 0 : vector<48x128xf32>, i32 -> vector<48x128xf32>
    %21 = arith.truncf %20 : vector<48x128xf32> to vector<48x128xbf16>
    %c2 = arith.constant 2 : index
    %c0_15 = arith.constant 0 : index
    %c0_16 = arith.constant 0 : index
    %22 = vector.load %arg2[%c2, %c0_15, %c0_16] : memref<6x128x128xbf16, #tpu.memory_space<vmem>>, vector<1x128x128xbf16>
    %23 = vector.shape_cast %22 : vector<1x128x128xbf16> to vector<128x128xbf16>
    %cst_17 = arith.constant dense<0.000000e+00> : vector<48x128xf32>
    %24 = tpu.matmul %21, %23, %cst_17 {dimension_numbers = #tpu.dot_dimension_numbers<[1], [0], [0], [1], [0, 0, 1, 1], [], []>} : vector<48x128xbf16>, vector<128x128xbf16>, vector<48x128xf32> -> vector<48x128xf32>
    %25 = arith.addf %19, %24 : vector<48x128xf32>
    %26 = vector.broadcast %8 : vector<1x128xf32> to vector<48x128xf32>
    %27 = arith.mulf %25, %26 : vector<48x128xf32>
    %28 = vector.broadcast %9 : vector<1x128xf32> to vector<48x128xf32>
    %29 = arith.addf %27, %28 : vector<48x128xf32>
    %cst_18 = arith.constant 0.000000e+00 : f32
    %30 = vector.broadcast %cst_18 : f32 to vector<48x128xf32>
    %31 = arith.maximumf %29, %30 : vector<48x128xf32>
    %32 = arith.mulf %31, %7 : vector<48x128xf32>
    %c1_19 = arith.constant 1 : index
    %c0_20 = arith.constant 0 : index
    %33 = vector.load %arg3[%c1_19, %c0_20] : memref<2x128xf32, #tpu.memory_space<vmem>>, vector<1x128xf32>
    %c1_21 = arith.constant 1 : index
    %c0_22 = arith.constant 0 : index
    %34 = vector.load %arg4[%c1_21, %c0_22] : memref<2x128xf32, #tpu.memory_space<vmem>>, vector<1x128xf32>
    %c1_i32_23 = arith.constant 1 : i32
    %35 = tpu.dynamic_rotate %32 by %c1_i32_23 dim 0 : vector<48x128xf32>, i32 -> vector<48x128xf32>
    %36 = arith.truncf %35 : vector<48x128xf32> to vector<48x128xbf16>
    %c3 = arith.constant 3 : index
    %c0_24 = arith.constant 0 : index
    %c0_25 = arith.constant 0 : index
    %37 = vector.load %arg2[%c3, %c0_24, %c0_25] : memref<6x128x128xbf16, #tpu.memory_space<vmem>>, vector<1x128x128xbf16>
    %38 = vector.shape_cast %37 : vector<1x128x128xbf16> to vector<128x128xbf16>
    %cst_26 = arith.constant dense<0.000000e+00> : vector<48x128xf32>
    %39 = tpu.matmul %36, %38, %cst_26 {dimension_numbers = #tpu.dot_dimension_numbers<[1], [0], [0], [1], [0, 0, 1, 1], [], []>} : vector<48x128xbf16>, vector<128x128xbf16>, vector<48x128xf32> -> vector<48x128xf32>
    %40 = arith.truncf %32 : vector<48x128xf32> to vector<48x128xbf16>
    %c4 = arith.constant 4 : index
    %c0_27 = arith.constant 0 : index
    %c0_28 = arith.constant 0 : index
    %41 = vector.load %arg2[%c4, %c0_27, %c0_28] : memref<6x128x128xbf16, #tpu.memory_space<vmem>>, vector<1x128x128xbf16>
    %42 = vector.shape_cast %41 : vector<1x128x128xbf16> to vector<128x128xbf16>
    %cst_29 = arith.constant dense<0.000000e+00> : vector<48x128xf32>
    %43 = tpu.matmul %40, %42, %cst_29 {dimension_numbers = #tpu.dot_dimension_numbers<[1], [0], [0], [1], [0, 0, 1, 1], [], []>} : vector<48x128xbf16>, vector<128x128xbf16>, vector<48x128xf32> -> vector<48x128xf32>
    %44 = arith.addf %39, %43 : vector<48x128xf32>
    %c47_i32_30 = arith.constant 47 : i32
    %45 = tpu.dynamic_rotate %32 by %c47_i32_30 dim 0 : vector<48x128xf32>, i32 -> vector<48x128xf32>
    %46 = arith.truncf %45 : vector<48x128xf32> to vector<48x128xbf16>
    %c5 = arith.constant 5 : index
    %c0_31 = arith.constant 0 : index
    %c0_32 = arith.constant 0 : index
    %47 = vector.load %arg2[%c5, %c0_31, %c0_32] : memref<6x128x128xbf16, #tpu.memory_space<vmem>>, vector<1x128x128xbf16>
    %48 = vector.shape_cast %47 : vector<1x128x128xbf16> to vector<128x128xbf16>
    %cst_33 = arith.constant dense<0.000000e+00> : vector<48x128xf32>
    %49 = tpu.matmul %46, %48, %cst_33 {dimension_numbers = #tpu.dot_dimension_numbers<[1], [0], [0], [1], [0, 0, 1, 1], [], []>} : vector<48x128xbf16>, vector<128x128xbf16>, vector<48x128xf32> -> vector<48x128xf32>
    %50 = arith.addf %44, %49 : vector<48x128xf32>
    %51 = vector.broadcast %33 : vector<1x128xf32> to vector<48x128xf32>
    %52 = arith.mulf %50, %51 : vector<48x128xf32>
    %53 = vector.broadcast %34 : vector<1x128xf32> to vector<48x128xf32>
    %54 = arith.addf %52, %53 : vector<48x128xf32>
    %55 = vector.shape_cast %54 : vector<48x128xf32> to vector<2x24x128xf32>
    %56 = vector.extract_strided_slice %55 {offsets = [0, 0, 0], sizes = [2, 16, 128], strides = [1, 1, 1]} : vector<2x24x128xf32> to vector<2x16x128xf32>
    %57 = arith.addf %0, %56 : vector<2x16x128xf32>
    %cst_34 = arith.constant 0.000000e+00 : f32
    %58 = vector.broadcast %cst_34 : f32 to vector<2x16x128xf32>
    %59 = arith.maximumf %57, %58 : vector<2x16x128xf32>
    %c0_35 = arith.constant 0 : index
    %c0_36 = arith.constant 0 : index
    %c0_37 = arith.constant 0 : index
    %60 = vector.load %arg5[%c0_35, %c0_36, %c0_37] : memref<2x16x128xf32, #tpu.memory_space<vmem>>, vector<2x16x128xf32>
    tpu.vector_store %arg5[%c0_35, %c0_36, %c0_37], %59 {strides = array<i32>} : memref<2x16x128xf32, #tpu.memory_space<vmem>>, vector<2x16x128xf32>,
    return
  }
  func.func @transform_0(%arg0: i32) -> (i32, i32, i32) {
    %c0_i32 = arith.constant 0 : i32
    %c0_i32_0 = arith.constant 0 : i32
    %c0_i32_1 = arith.constant 0 : i32
    return %arg0, %c0_i32, %c0_i32_0 : i32, i32, i32
  }
  func.func @transform_1(%arg0: i32) -> (i32, i32, i32) {
    %c0_i32 = arith.constant 0 : i32
    %c0_i32_0 = arith.constant 0 : i32
    %c0_i32_1 = arith.constant 0 : i32
    %c0_i32_2 = arith.constant 0 : i32
    return %c0_i32, %c0_i32_0, %c0_i32_1 : i32, i32, i32
  }
  func.func @transform_2(%arg0: i32) -> (i32, i32) {
    %c0_i32 = arith.constant 0 : i32
    %c0_i32_0 = arith.constant 0 : i32
    %c0_i32_1 = arith.constant 0 : i32
    return %c0_i32, %c0_i32_0 : i32, i32
  }
  func.func @transform_3(%arg0: i32) -> (i32, i32) {
    %c0_i32 = arith.constant 0 : i32
    %c0_i32_0 = arith.constant 0 : i32
    %c0_i32_1 = arith.constant 0 : i32
    return %c0_i32, %c0_i32_0 : i32, i32
  }
  func.func @transform_4(%arg0: i32) -> (i32, i32, i32) {
    %c0_i32 = arith.constant 0 : i32
    %c0_i32_0 = arith.constant 0 : i32
    %c0_i32_1 = arith.constant 0 : i32
    return %arg0, %c0_i32, %c0_i32_0 : i32, i32, i32
  }
}

</mosaic_0001>

<llo_original>
// kernel: tpu_custom_call.1
$region0: #{tpu_custom_call.1}
  #allocation0 [shape = 'u32[]', space=smem, size = 0x4, offset = 0x4, fixed_abs, tag = 'smem constant byte address 0x4 - core index']
  #allocation1 [shape = 'u32[144,128]{1,0:T(1,128)}', space=vmem, size = 0x12000, scoped, tag = 'internal scratch']
  %s0 = inlined_call_operand.hbm [shape: f32[2,16,128], index: 0, kind: input, shape index: {}]
  %s1 = inlined_call_operand.hbm [shape: bf16[6,128,128], index: 1, kind: input, shape index: {}]
  %s2 = inlined_call_operand.vmem [shape: f32[2,128], index: 2, kind: input, shape index: {}]
  %s3 = inlined_call_operand.vmem [shape: f32[2,128], index: 3, kind: input, shape index: {}]
  %s4 = inlined_call_operand.hbm [shape: f32[2,16,128], index: 4, kind: output, shape index: {}]
  %s5 = sld [smem:[#allocation0]]
  $region34: #{tpu_custom_call.1} parent=0
    _
  %s7 = ssub.s32 1, %s5
  %s8 = scalar_select 0, %s7, %s5
  $region1: #{tpu_custom_call.1} parent=0
    #allocation2 [shape = 'u8[16384]{0}', space=vmem, size = 0x4000, scoped, tag = 'input window, operand 0, single buffered']
    #allocation3 [shape = 's32[1]{0}', space=sflag, size = 0x4, scoped, tag = 'scoped memory for tpu_custom_call.1']
    #allocation4 [shape = 's32[1]{0}', space=sflag, size = 0x4, scoped, tag = 'scoped memory for tpu_custom_call.1']
    #allocation5 [shape = 'u8[196608]{0}', space=vmem, size = 0x30000, scoped, tag = 'input window, operand 1, single buffered']
    #allocation6 [shape = 's32[1]{0}', space=sflag, size = 0x4, scoped, tag = 'scoped memory for tpu_custom_call.1']
    #allocation7 [shape = 'u8[16384]{0}', space=vmem, size = 0x4000, scoped, tag = 'output window, operand 0, single buffered']
    %9 = vsyncpa [#allocation3], 0
    %10 = vsyncpa [#allocation6], 0
    %11 = vsyncpa [#allocation4], 0
    // Predicated region
    $region2: #{tpu_custom_call.1} parent=1 // pred_check
      _
    $region3: #{tpu_custom_call.1} parent=1 // pred_check_branch
      %13 = sbr.rel (0) target = $region5
    $region4: #{tpu_custom_call.1} parent=1 // pred_region
      %s15 = ssub.s32 512, 512
      %16 = vsyncadd [#allocation3], %s15
      %s17 = sshll.u32 [#allocation2], 4
      %s18 = int_to_ptr.vmem [resolvable:$true] %s17
      %23 = dma.hbm_to_vmem [thread:$0]  %s0, 512, %s18, [#allocation3], 128, 128, 8
    $region5: #{tpu_custom_call.1} parent=1 // pred_fallthru
      _
    // Predicated region
    $region6: #{tpu_custom_call.1} parent=1 // pred_check
      _
    $region7: #{tpu_custom_call.1} parent=1 // pred_check_branch
      %25 = sbr.rel (0) target = $region9
    $region8: #{tpu_custom_call.1} parent=1 // pred_region
      %s27 = ssub.s32 6144, 6144
      %28 = vsyncadd [#allocation6], %s27
      %s29 = sshll.u32 [#allocation5], 4
      %s30 = int_to_ptr.vmem [resolvable:$true] %s29
      %35 = dma.hbm_to_vmem [thread:$0]  %s1, 6144, %s30, [#allocation6], 64, 64, 4
    $region9: #{tpu_custom_call.1} parent=1 // pred_fallthru
      _
    // Predicated region
    $region10: #{tpu_custom_call.1} parent=1 // pred_check
      _
    $region11: #{tpu_custom_call.1} parent=1 // pred_check_branch
      %37 = sbr.rel (0) target = $region13
    $region12: #{tpu_custom_call.1} parent=1 // pred_region
      _
    $region13: #{tpu_custom_call.1} parent=1 // pred_fallthru
      _
    // Predicated region
    $region14: #{tpu_custom_call.1} parent=1 // pred_check
      _
    $region15: #{tpu_custom_call.1} parent=1 // pred_check_branch
      %39 = sbr.rel (0) target = $region17
    $region16: #{tpu_custom_call.1} parent=1 // pred_region
      _
    $region17: #{tpu_custom_call.1} parent=1 // pred_fallthru
      _
    // Predicated region
    $region18: #{tpu_custom_call.1} parent=1 // pred_check
      _
    $region19: #{tpu_custom_call.1} parent=1 // pred_check_branch
      %41 = sbr.rel (0) target = $region21
    $region20: #{tpu_custom_call.1} parent=1 // pred_region
      %42 = dma.done [#allocation3], 512
    $region21: #{tpu_custom_call.1} parent=1 // pred_fallthru
      _
    // Predicated region
    $region22: #{tpu_custom_call.1} parent=1 // pred_check
      _
    $region23: #{tpu_custom_call.1} parent=1 // pred_check_branch
      %44 = sbr.rel (0) target = $region25
    $region24: #{tpu_custom_call.1} parent=1 // pred_region
      %45 = dma.done [#allocation6], 6144
    $region25: #{tpu_custom_call.1} parent=1 // pred_fallthru
      _
    %v47 = vld [vmem:[#allocation2] sm:$0xff]
    %v48 = vld [vmem:[#allocation2 + $0x8] sm:$0xff]
    %v49 = vld [vmem:[#allocation2 + $0x10] sm:$0xff]
    %v50 = vld [vmem:[#allocation2 + $0x18] sm:$0xff]
    %v51 = vld [vmem:[%s2] sm:$0x1]
    %v52 = vld [vmem:[%s3] sm:$0x1]
    %v53 = vrot.slane %v47, 7
    %v54 = vrot.slane %v48, 7
    %v55 = vrot.slane %v49, 7
    %v56 = vrot.slane %v50, 7
    %v57 = vlaneseq
    %v58 = vshrl.u32 %v57, 7
    %vm59 = vcmp.lt.s32.totalorder %v58, 1
    %v60 = vsel %vm59, %v56, 0.0
    %v61 = vsel %vm59, %v55, %v56
    %v62 = vsel %vm59, 0.0, %v55
    %v63 = vsel %vm59, %v54, 0.0
    %v64 = vsel %vm59, %v53, %v54
    %v65 = vsel %vm59, 0.0, %v53
    %v66 = vpack.c.bf16 %v64, %v65
    %v67 = vpack.c.bf16 %v62, %v63
    %v68 = vpack.c.bf16 %v60, %v61
    %v69 = vld [vmem:[#allocation5] sm:$0xf]
    %v70 = vld [vmem:[#allocation5 + $0x4] sm:$0xf]
    %v71 = vld [vmem:[#allocation5 + $0x8] sm:$0xf]
    %v72 = vld [vmem:[#allocation5 + $0xc] sm:$0xf]
    %v73 = vld [vmem:[#allocation5 + $0x10] sm:$0xf]
    %v74 = vld [vmem:[#allocation5 + $0x14] sm:$0xf]
    %v75 = vld [vmem:[#allocation5 + $0x18] sm:$0xf]
    %v76 = vld [vmem:[#allocation5 + $0x1c] sm:$0xf]
    %v77 = vld [vmem:[#allocation5 + $0x20] sm:$0xf]
    %v78 = vld [vmem:[#allocation5 + $0x24] sm:$0xf]
    %v79 = vld [vmem:[#allocation5 + $0x28] sm:$0xf]
    %v80 = vld [vmem:[#allocation5 + $0x2c] sm:$0xf]
    %v81 = vld [vmem:[#allocation5 + $0x30] sm:$0xf]
    %v82 = vld [vmem:[#allocation5 + $0x34] sm:$0xf]
    %v83 = vld [vmem:[#allocation5 + $0x38] sm:$0xf]
    %v84 = vld [vmem:[#allocation5 + $0x3c] sm:$0xf]
    %v85 = vpack.c.bf16 %v48, %v47
    %v86 = vpack.c.bf16 %v49, 0.0
    %v87 = vpack.c.bf16 0.0, %v50
    %s88 = scalar_lea.vmem [#allocation5], 64
    %v89 = vld [vmem:[%s88] sm:$0xf]
    %v90 = vld [vmem:[%s88 + $0x4] sm:$0xf]
    %v91 = vld [vmem:[%s88 + $0x8] sm:$0xf]
    %v92 = vld [vmem:[%s88 + $0xc] sm:$0xf]
    %v93 = vld [vmem:[%s88 + $0x10] sm:$0xf]
    %v94 = vld [vmem:[%s88 + $0x14] sm:$0xf]
    %v95 = vld [vmem:[%s88 + $0x18] sm:$0xf]
    %v96 = vld [vmem:[%s88 + $0x1c] sm:$0xf]
    %v97 = vld [vmem:[%s88 + $0x20] sm:$0xf]
    %v98 = vld [vmem:[%s88 + $0x24] sm:$0xf]
    %v99 = vld [vmem:[%s88 + $0x28] sm:$0xf]
    %v100 = vld [vmem:[%s88 + $0x2c] sm:$0xf]
    %v101 = vld [vmem:[%s88 + $0x30] sm:$0xf]
    %v102 = vld [vmem:[%s88 + $0x34] sm:$0xf]
    %v103 = vld [vmem:[%s88 + $0x38] sm:$0xf]
    %v104 = vld [vmem:[%s88 + $0x3c] sm:$0xf]
    %v121 = vunpack.c.l.b16 %v89
    %v122 = vunpack.c.l.b16 %v90
    %v123 = vunpack.c.l.b16 %v91
    %v124 = vunpack.c.l.b16 %v92
    %v125 = vunpack.c.l.b16 %v93
    %v126 = vunpack.c.l.b16 %v94
    %v127 = vunpack.c.l.b16 %v95
    %v128 = vunpack.c.l.b16 %v96
    %v129 = vunpack.c.l.b16 %v97
    %v130 = vunpack.c.l.b16 %v98
    %v131 = vunpack.c.l.b16 %v99
    %v132 = vunpack.c.l.b16 %v100
    %v133 = vunpack.c.l.b16 %v101
    %v134 = vunpack.c.l.b16 %v102
    %v135 = vunpack.c.l.b16 %v103
    %v136 = vunpack.c.l.b16 %v104
    %v137 = vpack.c.b16 %v122, %v121
    %v138 = vpack.c.b16 %v124, %v123
    %v139 = vpack.c.b16 %v126, %v125
    %v140 = vpack.c.b16 %v128, %v127
    %v141 = vpack.c.b16 %v130, %v129
    %v142 = vpack.c.b16 %v132, %v131
    %v143 = vpack.c.b16 %v134, %v133
    %v144 = vpack.c.b16 %v136, %v135
    %153 = vmatprep.subr.bf16.mxu0 0
    %154 = vmatpush1.bf16.msra.mxu0 %v137
    %155 = vmatprep.subr.bf16.mxu0 0
    %156 = vmatpush1.bf16.msra.mxu0 %v138
    %157 = vmatprep.subr.bf16.mxu0 0
    %158 = vmatpush1.bf16.msra.mxu0 %v139
    %159 = vmatprep.subr.bf16.mxu0 0
    %160 = vmatpush1.bf16.msra.mxu0 %v140
    %161 = vmatprep.subr.bf16.mxu0 0
    %162 = vmatpush1.bf16.msra.mxu0 %v141
    %163 = vmatprep.subr.bf16.mxu0 0
    %164 = vmatpush1.bf16.msra.mxu0 %v142
    %165 = vmatprep.subr.bf16.mxu0 0
    %166 = vmatpush1.bf16.msra.mxu0 %v143
    %167 = vmatprep.subr.bf16.mxu0 0
    %168 = vmatpush1.bf16.msra.mxu0 %v144
    %169 = vmatprep.subr.bf16.mxu0 0
    %170 = vmatpush1.bf16.msra.mxu0 0
    %171 = vmatprep.subr.bf16.mxu0 0
    %172 = vmatpush1.bf16.msra.mxu0 0
    %173 = vmatprep.subr.bf16.mxu0 0
    %174 = vmatpush1.bf16.msra.mxu0 0
    %175 = vmatprep.subr.bf16.mxu0 0
    %176 = vmatpush1.bf16.msra.mxu0 0
    %177 = vmatprep.subr.bf16.mxu0 0
    %178 = vmatpush1.bf16.msra.mxu0 0
    %179 = vmatprep.subr.bf16.mxu0 0
    %180 = vmatpush1.bf16.msra.mxu0 0
    %181 = vmatprep.subr.bf16.mxu0 0
    %182 = vmatpush1.bf16.msra.mxu0 0
    %183 = vmatprep.subr.bf16.mxu0 0
    %184 = vmatpush1.bf16.msra.mxu0 0
    %185 = vmatprep.mubr.bf16.mxu0 0
    %186 = vmatmul.mubr.bf16.gmra.mrb[0].mxu0 %v85
    %v187 = vpop.f32.mrb[0].mxu0
    %v188 = vadd.f32 0.0, %v187
    %v189 = vpop.f32.mrb[0].mxu0
    %v190 = vpop.f32.mrb[0].mxu0
    %v191 = vadd.f32 0.0, %v190
    %v192 = vpop.f32.mrb[0].mxu0
    %193 = vmatprep.mubr.bf16.mxu0 0
    %194 = vmatmul.mubr.bf16.gmra.mrb[0].mxu0 %v86
    %v195 = vpop.f32.mrb[0].mxu0
    %v196 = vadd.f32 0.0, %v195
    %v197 = vpop.f32.mrb[0].mxu0
    %v198 = vpop.f32.mrb[0].mxu0
    %v199 = vadd.f32 0.0, %v198
    %v200 = vpop.f32.mrb[0].mxu0
    %201 = vmatprep.mubr.bf16.mxu0 0
    %202 = vmatmul.mubr.bf16.gmra.mrb[0].mxu0 %v87
    %v203 = vpop.f32.mrb[0].mxu0
    %v204 = vadd.f32 0.0, %v203
    %v205 = vpop.f32.mrb[0].mxu0
    %v206 = vpop.f32.mrb[0].mxu0
    %v207 = vadd.f32 0.0, %v206
    %v208 = vpop.f32.mrb[0].mxu0
    %209 = vdwg.mxu0
    %v226 = vunpack.c.l.b16 %v69
    %v227 = vunpack.c.l.b16 %v70
    %v228 = vunpack.c.l.b16 %v71
    %v229 = vunpack.c.l.b16 %v72
    %v230 = vunpack.c.l.b16 %v73
    %v231 = vunpack.c.l.b16 %v74
    %v232 = vunpack.c.l.b16 %v75
    %v233 = vunpack.c.l.b16 %v76
    %v234 = vunpack.c.l.b16 %v77
    %v235 = vunpack.c.l.b16 %v78
    %v236 = vunpack.c.l.b16 %v79
    %v237 = vunpack.c.l.b16 %v80
    %v238 = vunpack.c.l.b16 %v81
    %v239 = vunpack.c.l.b16 %v82
    %v240 = vunpack.c.l.b16 %v83
    %v241 = vunpack.c.l.b16 %v84
    %v242 = vpack.c.b16 %v227, %v226
    %v243 = vpack.c.b16 %v229, %v228
    %v244 = vpack.c.b16 %v231, %v230
    %v245 = vpack.c.b16 %v233, %v232
    %v246 = vpack.c.b16 %v235, %v234
    %v247 = vpack.c.b16 %v237, %v236
    %v248 = vpack.c.b16 %v239, %v238
    %v249 = vpack.c.b16 %v241, %v240
    %258 = vmatprep.subr.bf16.mxu0 0
    %259 = vmatpush1.bf16.msra.mxu0 %v242
    %260 = vmatprep.subr.bf16.mxu0 0
    %261 = vmatpush1.bf16.msra.mxu0 %v243
    %262 = vmatprep.subr.bf16.mxu0 0
    %263 = vmatpush1.bf16.msra.mxu0 %v244
    %264 = vmatprep.subr.bf16.mxu0 0
    %265 = vmatpush1.bf16.msra.mxu0 %v245
    %266 = vmatprep.subr.bf16.mxu0 0
    %267 = vmatpush1.bf16.msra.mxu0 %v246
    %268 = vmatprep.subr.bf16.mxu0 0
    %269 = vmatpush1.bf16.msra.mxu0 %v247
    %270 = vmatprep.subr.bf16.mxu0 0
    %271 = vmatpush1.bf16.msra.mxu0 %v248
    %272 = vmatprep.subr.bf16.mxu0 0
    %273 = vmatpush1.bf16.msra.mxu0 %v249
    %274 = vmatprep.subr.bf16.mxu0 0
    %275 = vmatpush1.bf16.msra.mxu0 0
    %276 = vmatprep.subr.bf16.mxu0 0
    %277 = vmatpush1.bf16.msra.mxu0 0
    %278 = vmatprep.subr.bf16.mxu0 0
    %279 = vmatpush1.bf16.msra.mxu0 0
    %280 = vmatprep.subr.bf16.mxu0 0
    %281 = vmatpush1.bf16.msra.mxu0 0
    %282 = vmatprep.subr.bf16.mxu0 0
    %283 = vmatpush1.bf16.msra.mxu0 0
    %284 = vmatprep.subr.bf16.mxu0 0
    %285 = vmatpush1.bf16.msra.mxu0 0
    %286 = vmatprep.subr.bf16.mxu0 0
    %287 = vmatpush1.bf16.msra.mxu0 0
    %288 = vmatprep.subr.bf16.mxu0 0
    %289 = vmatpush1.bf16.msra.mxu0 0
    %290 = vmatprep.mubr.bf16.mxu0 0
    %291 = vmatmul.mubr.bf16.gmra.mrb[0].mxu0 %v66
    %v292 = vpop.f32.mrb[0].mxu0
    %v293 = vadd.f32 %v188, %v292
    %v294 = vpop.f32.mrb[0].mxu0
    %v295 = vpop.f32.mrb[0].mxu0
    %v296 = vadd.f32 %v191, %v295
    %v297 = vpop.f32.mrb[0].mxu0
    %298 = vmatprep.mubr.bf16.mxu0 0
    %299 = vmatmul.mubr.bf16.gmra.mrb[0].mxu0 %v67
    %v300 = vpop.f32.mrb[0].mxu0
    %v301 = vadd.f32 %v196, %v300
    %v302 = vpop.f32.mrb[0].mxu0
    %v303 = vpop.f32.mrb[0].mxu0
    %v304 = vadd.f32 %v199, %v303
    %v305 = vpop.f32.mrb[0].mxu0
    %306 = vmatprep.mubr.bf16.mxu0 0
    %307 = vmatmul.mubr.bf16.gmra.mrb[0].mxu0 %v68
    %v308 = vpop.f32.mrb[0].mxu0
    %v309 = vadd.f32 %v204, %v308
    %v310 = vpop.f32.mrb[0].mxu0
    %v311 = vpop.f32.mrb[0].mxu0
    %v312 = vadd.f32 %v207, %v311
    %v313 = vpop.f32.mrb[0].mxu0
    %314 = vdwg.mxu0
    %v315 = vrot.slane %v47, 1
    %v316 = vrot.slane %v48, 1
    %v317 = vrot.slane %v49, 1
    %v318 = vrot.slane %v50, 1
    %vm319 = vcmp.lt.s32.totalorder %v58, 7
    %v320 = vsel %vm319, %v318, 0.0
    %v321 = vsel %vm319, %v317, %v318
    %v322 = vsel %vm319, 0.0, %v317
    %v323 = vsel %vm319, %v316, 0.0
    %v324 = vsel %vm319, %v315, %v316
    %v325 = vsel %vm319, 0.0, %v315
    %v326 = vpack.c.bf16 %v323, %v324
    %v327 = vpack.c.bf16 %v321, %v322
    %v328 = vpack.c.bf16 %v325, %v320
    %s329 = scalar_lea.vmem [#allocation5], 128
    %v330 = vld [vmem:[%s329] sm:$0xf]
    %v331 = vld [vmem:[%s329 + $0x4] sm:$0xf]
    %v332 = vld [vmem:[%s329 + $0x8] sm:$0xf]
    %v333 = vld [vmem:[%s329 + $0xc] sm:$0xf]
    %v334 = vld [vmem:[%s329 + $0x10] sm:$0xf]
    %v335 = vld [vmem:[%s329 + $0x14] sm:$0xf]
    %v336 = vld [vmem:[%s329 + $0x18] sm:$0xf]
    %v337 = vld [vmem:[%s329 + $0x1c] sm:$0xf]
    %v338 = vld [vmem:[%s329 + $0x20] sm:$0xf]
    %v339 = vld [vmem:[%s329 + $0x24] sm:$0xf]
    %v340 = vld [vmem:[%s329 + $0x28] sm:$0xf]
    %v341 = vld [vmem:[%s329 + $0x2c] sm:$0xf]
    %v342 = vld [vmem:[%s329 + $0x30] sm:$0xf]
    %v343 = vld [vmem:[%s329 + $0x34] sm:$0xf]
    %v344 = vld [vmem:[%s329 + $0x38] sm:$0xf]
    %v345 = vld [vmem:[%s329 + $0x3c] sm:$0xf]
    %v362 = vunpack.c.l.b16 %v330
    %v363 = vunpack.c.l.b16 %v331
    %v364 = vunpack.c.l.b16 %v332
    %v365 = vunpack.c.l.b16 %v333
    %v366 = vunpack.c.l.b16 %v334
    %v367 = vunpack.c.l.b16 %v335
    %v368 = vunpack.c.l.b16 %v336
    %v369 = vunpack.c.l.b16 %v337
    %v370 = vunpack.c.l.b16 %v338
    %v371 = vunpack.c.l.b16 %v339
    %v372 = vunpack.c.l.b16 %v340
    %v373 = vunpack.c.l.b16 %v341
    %v374 = vunpack.c.l.b16 %v342
    %v375 = vunpack.c.l.b16 %v343
    %v376 = vunpack.c.l.b16 %v344
    %v377 = vunpack.c.l.b16 %v345
    %v378 = vpack.c.b16 %v363, %v362
    %v379 = vpack.c.b16 %v365, %v364
    %v380 = vpack.c.b16 %v367, %v366
    %v381 = vpack.c.b16 %v369, %v368
    %v382 = vpack.c.b16 %v371, %v370
    %v383 = vpack.c.b16 %v373, %v372
    %v384 = vpack.c.b16 %v375, %v374
    %v385 = vpack.c.b16 %v377, %v376
    %394 = vmatprep.subr.bf16.mxu0 0
    %395 = vmatpush1.bf16.msra.mxu0 %v378
    %396 = vmatprep.subr.bf16.mxu0 0
    %397 = vmatpush1.bf16.msra.mxu0 %v379
    %398 = vmatprep.subr.bf16.mxu0 0
    %399 = vmatpush1.bf16.msra.mxu0 %v380
    %400 = vmatprep.subr.bf16.mxu0 0
    %401 = vmatpush1.bf16.msra.mxu0 %v381
    %402 = vmatprep.subr.bf16.mxu0 0
    %403 = vmatpush1.bf16.msra.mxu0 %v382
    %404 = vmatprep.subr.bf16.mxu0 0
    %405 = vmatpush1.bf16.msra.mxu0 %v383
    %406 = vmatprep.subr.bf16.mxu0 0
    %407 = vmatpush1.bf16.msra.mxu0 %v384
    %408 = vmatprep.subr.bf16.mxu0 0
    %409 = vmatpush1.bf16.msra.mxu0 %v385
    %410 = vmatprep.subr.bf16.mxu0 0
    %411 = vmatpush1.bf16.msra.mxu0 0
    %412 = vmatprep.subr.bf16.mxu0 0
    %413 = vmatpush1.bf16.msra.mxu0 0
    %414 = vmatprep.subr.bf16.mxu0 0
    %415 = vmatpush1.bf16.msra.mxu0 0
    %416 = vmatprep.subr.bf16.mxu0 0
    %417 = vmatpush1.bf16.msra.mxu0 0
    %418 = vmatprep.subr.bf16.mxu0 0
    %419 = vmatpush1.bf16.msra.mxu0 0
    %420 = vmatprep.subr.bf16.mxu0 0
    %421 = vmatpush1.bf16.msra.mxu0 0
    %422 = vmatprep.subr.bf16.mxu0 0
    %423 = vmatpush1.bf16.msra.mxu0 0
    %424 = vmatprep.subr.bf16.mxu0 0
    %425 = vmatpush1.bf16.msra.mxu0 0
    %426 = vmatprep.mubr.bf16.mxu0 0
    %427 = vmatmul.mubr.bf16.gmra.mrb[0].mxu0 %v326
    %v428 = vpop.f32.mrb[0].mxu0
    %v429 = vadd.f32 0.0, %v428
    %v430 = vpop.f32.mrb[0].mxu0
    %v431 = vpop.f32.mrb[0].mxu0
    %v432 = vadd.f32 0.0, %v431
    %v433 = vpop.f32.mrb[0].mxu0
    %434 = vmatprep.mubr.bf16.mxu0 0
    %435 = vmatmul.mubr.bf16.gmra.mrb[0].mxu0 %v327
    %v436 = vpop.f32.mrb[0].mxu0
    %v437 = vadd.f32 0.0, %v436
    %v438 = vpop.f32.mrb[0].mxu0
    %v439 = vpop.f32.mrb[0].mxu0
    %v440 = vadd.f32 0.0, %v439
    %v441 = vpop.f32.mrb[0].mxu0
    %442 = vmatprep.mubr.bf16.mxu0 0
    %443 = vmatmul.mubr.bf16.gmra.mrb[0].mxu0 %v328
    %v444 = vpop.f32.mrb[0].mxu0
    %v445 = vadd.f32 0.0, %v444
    %v446 = vpop.f32.mrb[0].mxu0
    %v447 = vpop.f32.mrb[0].mxu0
    %v448 = vadd.f32 0.0, %v447
    %v449 = vpop.f32.mrb[0].mxu0
    %450 = vdwg.mxu0
    %v451 = vadd.f32 %v293, %v429
    %v452 = vadd.f32 %v296, %v432
    %v453 = vadd.f32 %v301, %v437
    %v454 = vadd.f32 %v304, %v440
    %v455 = vadd.f32 %v309, %v445
    %v456 = vadd.f32 %v312, %v448
    %v457 = vlaneseq
    %v458 = vshrl.u32 %v457, 7
    %v459 = vsub.s32 0, %v458
    %v460 = vrot.slane %v51, %v459
    %v461 = vmul.f32 %v451, %v460
    %v462 = vmul.f32 %v452, %v460
    %v463 = vmul.f32 %v453, %v460
    %v464 = vmul.f32 %v454, %v460
    %v465 = vmul.f32 %v455, %v460
    %v466 = vmul.f32 %v456, %v460
    %v467 = vlaneseq
    %v468 = vshrl.u32 %v467, 7
    %v469 = vsub.s32 0, %v468
    %v470 = vrot.slane %v52, %v469
    %v471 = vadd.f32 %v461, %v470
    %v472 = vadd.f32 %v462, %v470
    %v473 = vadd.f32 %v463, %v470
    %v474 = vadd.f32 %v464, %v470
    %v475 = vadd.f32 %v465, %v470
    %v476 = vadd.f32 %v466, %v470
    %v477 = vmax.f32 %v471, 0.0
    %v478 = vmax.f32 %v472, 0.0
    %v479 = vmax.f32 %v473, 0.0
    %v480 = vmax.f32 %v474, 0.0
    %v481 = vmax.f32 %v475, 0.0
    %v482 = vmax.f32 %v476, 0.0
    %v483 = vmul.f32 %v479, 0.0
    %v484 = vmul.f32 %v482, 0.0
    %v485 = vld [vmem:[%s2 + $0x1] sm:$0x1]
    %v486 = vld [vmem:[%s3 + $0x1] sm:$0x1]
    %v487 = vrot.slane %v477, 7
    %v488 = vrot.slane %v478, 7
    %v489 = vrot.slane %v483, 7
    %v490 = vrot.slane %v480, 7
    %v491 = vrot.slane %v481, 7
    %v492 = vrot.slane %v484, 7
    %v493 = vsel %vm59, %v491, %v492
    %v494 = vsel %vm59, %v490, %v491
    %v495 = vsel %vm59, %v489, %v490
    %v496 = vsel %vm59, %v488, %v489
    %v497 = vsel %vm59, %v487, %v488
    %v498 = vsel %vm59, %v492, %v487
    %v499 = vpack.c.bf16 %v497, %v498
    %v500 = vpack.c.bf16 %v495, %v496
    %v501 = vpack.c.bf16 %v493, %v494
    %s502 = scalar_lea.vmem [#allocation5], 192
    %v503 = vld [vmem:[%s502] sm:$0xf]
    %v504 = vld [vmem:[%s502 + $0x4] sm:$0xf]
    %v505 = vld [vmem:[%s502 + $0x8] sm:$0xf]
    %v506 = vld [vmem:[%s502 + $0xc] sm:$0xf]
    %v507 = vld [vmem:[%s502 + $0x10] sm:$0xf]
    %v508 = vld [vmem:[%s502 + $0x14] sm:$0xf]
    %v509 = vld [vmem:[%s502 + $0x18] sm:$0xf]
    %v510 = vld [vmem:[%s502 + $0x1c] sm:$0xf]
    %v511 = vld [vmem:[%s502 + $0x20] sm:$0xf]
    %v512 = vld [vmem:[%s502 + $0x24] sm:$0xf]
    %v513 = vld [vmem:[%s502 + $0x28] sm:$0xf]
    %v514 = vld [vmem:[%s502 + $0x2c] sm:$0xf]
    %v515 = vld [vmem:[%s502 + $0x30] sm:$0xf]
    %v516 = vld [vmem:[%s502 + $0x34] sm:$0xf]
    %v517 = vld [vmem:[%s502 + $0x38] sm:$0xf]
    %v518 = vld [vmem:[%s502 + $0x3c] sm:$0xf]
    %v519 = vpack.c.bf16 %v478, %v477
    %v520 = vpack.c.bf16 %v480, %v483
    %v521 = vpack.c.bf16 %v484, %v481
    %s522 = scalar_lea.vmem [#allocation5], 256
    %v523 = vld [vmem:[%s522] sm:$0xf]
    %v524 = vld [vmem:[%s522 + $0x4] sm:$0xf]
    %v525 = vld [vmem:[%s522 + $0x8] sm:$0xf]
    %v526 = vld [vmem:[%s522 + $0xc] sm:$0xf]
    %v527 = vld [vmem:[%s522 + $0x10] sm:$0xf]
    %v528 = vld [vmem:[%s522 + $0x14] sm:$0xf]
    %v529 = vld [vmem:[%s522 + $0x18] sm:$0xf]
    %v530 = vld [vmem:[%s522 + $0x1c] sm:$0xf]
    %v531 = vld [vmem:[%s522 + $0x20] sm:$0xf]
    %v532 = vld [vmem:[%s522 + $0x24] sm:$0xf]
    %v533 = vld [vmem:[%s522 + $0x28] sm:$0xf]
    %v534 = vld [vmem:[%s522 + $0x2c] sm:$0xf]
    %v535 = vld [vmem:[%s522 + $0x30] sm:$0xf]
    %v536 = vld [vmem:[%s522 + $0x34] sm:$0xf]
    %v537 = vld [vmem:[%s522 + $0x38] sm:$0xf]
    %v538 = vld [vmem:[%s522 + $0x3c] sm:$0xf]
    %v555 = vunpack.c.l.b16 %v523
    %v556 = vunpack.c.l.b16 %v524
    %v557 = vunpack.c.l.b16 %v525
    %v558 = vunpack.c.l.b16 %v526
    %v559 = vunpack.c.l.b16 %v527
    %v560 = vunpack.c.l.b16 %v528
    %v561 = vunpack.c.l.b16 %v529
    %v562 = vunpack.c.l.b16 %v530
    %v563 = vunpack.c.l.b16 %v531
    %v564 = vunpack.c.l.b16 %v532
    %v565 = vunpack.c.l.b16 %v533
    %v566 = vunpack.c.l.b16 %v534
    %v567 = vunpack.c.l.b16 %v535
    %v568 = vunpack.c.l.b16 %v536
    %v569 = vunpack.c.l.b16 %v537
    %v570 = vunpack.c.l.b16 %v538
    %v571 = vpack.c.b16 %v556, %v555
    %v572 = vpack.c.b16 %v558, %v557
    %v573 = vpack.c.b16 %v560, %v559
    %v574 = vpack.c.b16 %v562, %v561
    %v575 = vpack.c.b16 %v564, %v563
    %v576 = vpack.c.b16 %v566, %v565
    %v577 = vpack.c.b16 %v568, %v567
    %v578 = vpack.c.b16 %v570, %v569
    %587 = vmatprep.subr.bf16.mxu0 0
    %588 = vmatpush1.bf16.msra.mxu0 %v571
    %589 = vmatprep.subr.bf16.mxu0 0
    %590 = vmatpush1.bf16.msra.mxu0 %v572
    %591 = vmatprep.subr.bf16.mxu0 0
    %592 = vmatpush1.bf16.msra.mxu0 %v573
    %593 = vmatprep.subr.bf16.mxu0 0
    %594 = vmatpush1.bf16.msra.mxu0 %v574
    %595 = vmatprep.subr.bf16.mxu0 0
    %596 = vmatpush1.bf16.msra.mxu0 %v575
    %597 = vmatprep.subr.bf16.mxu0 0
    %598 = vmatpush1.bf16.msra.mxu0 %v576
    %599 = vmatprep.subr.bf16.mxu0 0
    %600 = vmatpush1.bf16.msra.mxu0 %v577
    %601 = vmatprep.subr.bf16.mxu0 0
    %602 = vmatpush1.bf16.msra.mxu0 %v578
    %603 = vmatprep.subr.bf16.mxu0 0
    %604 = vmatpush1.bf16.msra.mxu0 0
    %605 = vmatprep.subr.bf16.mxu0 0
    %606 = vmatpush1.bf16.msra.mxu0 0
    %607 = vmatprep.subr.bf16.mxu0 0
    %608 = vmatpush1.bf16.msra.mxu0 0
    %609 = vmatprep.subr.bf16.mxu0 0
    %610 = vmatpush1.bf16.msra.mxu0 0
    %611 = vmatprep.subr.bf16.mxu0 0
    %612 = vmatpush1.bf16.msra.mxu0 0
    %613 = vmatprep.subr.bf16.mxu0 0
    %614 = vmatpush1.bf16.msra.mxu0 0
    %615 = vmatprep.subr.bf16.mxu0 0
    %616 = vmatpush1.bf16.msra.mxu0 0
    %617 = vmatprep.subr.bf16.mxu0 0
    %618 = vmatpush1.bf16.msra.mxu0 0
    %619 = vmatprep.mubr.bf16.mxu0 0
    %620 = vmatmul.mubr.bf16.gmra.mrb[0].mxu0 %v519
    %v621 = vpop.f32.mrb[0].mxu0
    %v622 = vadd.f32 0.0, %v621
    %v623 = vpop.f32.mrb[0].mxu0
    %v624 = vpop.f32.mrb[0].mxu0
    %v625 = vadd.f32 0.0, %v624
    %v626 = vpop.f32.mrb[0].mxu0
    %627 = vmatprep.mubr.bf16.mxu0 0
    %628 = vmatmul.mubr.bf16.gmra.mrb[0].mxu0 %v520
    %v629 = vpop.f32.mrb[0].mxu0
    %v630 = vpop.f32.mrb[0].mxu0
    %v631 = vpop.f32.mrb[0].mxu0
    %v632 = vadd.f32 0.0, %v631
    %v633 = vpop.f32.mrb[0].mxu0
    %634 = vmatprep.mubr.bf16.mxu0 0
    %635 = vmatmul.mubr.bf16.gmra.mrb[0].mxu0 %v521
    %v636 = vpop.f32.mrb[0].mxu0
    %v637 = vadd.f32 0.0, %v636
    %v638 = vpop.f32.mrb[0].mxu0
    %v639 = vpop.f32.mrb[0].mxu0
    %v640 = vpop.f32.mrb[0].mxu0
    %641 = vdwg.mxu0
    %v658 = vunpack.c.l.b16 %v503
    %v659 = vunpack.c.l.b16 %v504
    %v660 = vunpack.c.l.b16 %v505
    %v661 = vunpack.c.l.b16 %v506
    %v662 = vunpack.c.l.b16 %v507
    %v663 = vunpack.c.l.b16 %v508
    %v664 = vunpack.c.l.b16 %v509
    %v665 = vunpack.c.l.b16 %v510
    %v666 = vunpack.c.l.b16 %v511
    %v667 = vunpack.c.l.b16 %v512
    %v668 = vunpack.c.l.b16 %v513
    %v669 = vunpack.c.l.b16 %v514
    %v670 = vunpack.c.l.b16 %v515
    %v671 = vunpack.c.l.b16 %v516
    %v672 = vunpack.c.l.b16 %v517
    %v673 = vunpack.c.l.b16 %v518
    %v674 = vpack.c.b16 %v659, %v658
    %v675 = vpack.c.b16 %v661, %v660
    %v676 = vpack.c.b16 %v663, %v662
    %v677 = vpack.c.b16 %v665, %v664
    %v678 = vpack.c.b16 %v667, %v666
    %v679 = vpack.c.b16 %v669, %v668
    %v680 = vpack.c.b16 %v671, %v670
    %v681 = vpack.c.b16 %v673, %v672
    %690 = vmatprep.subr.bf16.mxu0 0
    %691 = vmatpush1.bf16.msra.mxu0 %v674
    %692 = vmatprep.subr.bf16.mxu0 0
    %693 = vmatpush1.bf16.msra.mxu0 %v675
    %694 = vmatprep.subr.bf16.mxu0 0
    %695 = vmatpush1.bf16.msra.mxu0 %v676
    %696 = vmatprep.subr.bf16.mxu0 0
    %697 = vmatpush1.bf16.msra.mxu0 %v677
    %698 = vmatprep.subr.bf16.mxu0 0
    %699 = vmatpush1.bf16.msra.mxu0 %v678
    %700 = vmatprep.subr.bf16.mxu0 0
    %701 = vmatpush1.bf16.msra.mxu0 %v679
    %702 = vmatprep.subr.bf16.mxu0 0
    %703 = vmatpush1.bf16.msra.mxu0 %v680
    %704 = vmatprep.subr.bf16.mxu0 0
    %705 = vmatpush1.bf16.msra.mxu0 %v681
    %706 = vmatprep.subr.bf16.mxu0 0
    %707 = vmatpush1.bf16.msra.mxu0 0
    %708 = vmatprep.subr.bf16.mxu0 0
    %709 = vmatpush1.bf16.msra.mxu0 0
    %710 = vmatprep.subr.bf16.mxu0 0
    %711 = vmatpush1.bf16.msra.mxu0 0
    %712 = vmatprep.subr.bf16.mxu0 0
    %713 = vmatpush1.bf16.msra.mxu0 0
    %714 = vmatprep.subr.bf16.mxu0 0
    %715 = vmatpush1.bf16.msra.mxu0 0
    %716 = vmatprep.subr.bf16.mxu0 0
    %717 = vmatpush1.bf16.msra.mxu0 0
    %718 = vmatprep.subr.bf16.mxu0 0
    %719 = vmatpush1.bf16.msra.mxu0 0
    %720 = vmatprep.subr.bf16.mxu0 0
    %721 = vmatpush1.bf16.msra.mxu0 0
    %722 = vmatprep.mubr.bf16.mxu0 0
    %723 = vmatmul.mubr.bf16.gmra.mrb[0].mxu0 %v499
    %v724 = vpop.f32.mrb[0].mxu0
    %v725 = vadd.f32 %v622, %v724
    %v726 = vpop.f32.mrb[0].mxu0
    %v727 = vpop.f32.mrb[0].mxu0
    %v728 = vadd.f32 %v625, %v727
    %v729 = vpop.f32.mrb[0].mxu0
    %730 = vmatprep.mubr.bf16.mxu0 0
    %731 = vmatmul.mubr.bf16.gmra.mrb[0].mxu0 %v500
    %v732 = vpop.f32.mrb[0].mxu0
    %v733 = vpop.f32.mrb[0].mxu0
    %v734 = vpop.f32.mrb[0].mxu0
    %v735 = vadd.f32 %v632, %v734
    %v736 = vpop.f32.mrb[0].mxu0
    %737 = vmatprep.mubr.bf16.mxu0 0
    %738 = vmatmul.mubr.bf16.gmra.mrb[0].mxu0 %v501
    %v739 = vpop.f32.mrb[0].mxu0
    %v740 = vadd.f32 %v637, %v739
    %v741 = vpop.f32.mrb[0].mxu0
    %v742 = vpop.f32.mrb[0].mxu0
    %v743 = vpop.f32.mrb[0].mxu0
    %744 = vdwg.mxu0
    %v745 = vrot.slane %v477, 1
    %v746 = vrot.slane %v478, 1
    %v747 = vrot.slane %v483, 1
    %v748 = vrot.slane %v480, 1
    %v749 = vrot.slane %v481, 1
    %v750 = vrot.slane %v484, 1
    %v751 = vsel %vm319, %v749, %v750
    %v752 = vsel %vm319, %v748, %v749
    %v753 = vsel %vm319, %v747, %v748
    %v754 = vsel %vm319, %v746, %v747
    %v755 = vsel %vm319, %v745, %v746
    %v756 = vsel %vm319, %v750, %v745
    %v757 = vpack.c.bf16 %v754, %v755
    %v758 = vpack.c.bf16 %v752, %v753
    %v759 = vpack.c.bf16 %v756, %v751
    %s760 = scalar_lea.vmem [#allocation5], 320
    %v761 = vld [vmem:[%s760] sm:$0xf]
    %v762 = vld [vmem:[%s760 + $0x4] sm:$0xf]
    %v763 = vld [vmem:[%s760 + $0x8] sm:$0xf]
    %v764 = vld [vmem:[%s760 + $0xc] sm:$0xf]
    %v765 = vld [vmem:[%s760 + $0x10] sm:$0xf]
    %v766 = vld [vmem:[%s760 + $0x14] sm:$0xf]
    %v767 = vld [vmem:[%s760 + $0x18] sm:$0xf]
    %v768 = vld [vmem:[%s760 + $0x1c] sm:$0xf]
    %v769 = vld [vmem:[%s760 + $0x20] sm:$0xf]
    %v770 = vld [vmem:[%s760 + $0x24] sm:$0xf]
    %v771 = vld [vmem:[%s760 + $0x28] sm:$0xf]
    %v772 = vld [vmem:[%s760 + $0x2c] sm:$0xf]
    %v773 = vld [vmem:[%s760 + $0x30] sm:$0xf]
    %v774 = vld [vmem:[%s760 + $0x34] sm:$0xf]
    %v775 = vld [vmem:[%s760 + $0x38] sm:$0xf]
    %v776 = vld [vmem:[%s760 + $0x3c] sm:$0xf]
    %v793 = vunpack.c.l.b16 %v761
    %v794 = vunpack.c.l.b16 %v762
    %v795 = vunpack.c.l.b16 %v763
    %v796 = vunpack.c.l.b16 %v764
    %v797 = vunpack.c.l.b16 %v765
    %v798 = vunpack.c.l.b16 %v766
    %v799 = vunpack.c.l.b16 %v767
    %v800 = vunpack.c.l.b16 %v768
    %v801 = vunpack.c.l.b16 %v769
    %v802 = vunpack.c.l.b16 %v770
    %v803 = vunpack.c.l.b16 %v771
    %v804 = vunpack.c.l.b16 %v772
    %v805 = vunpack.c.l.b16 %v773
    %v806 = vunpack.c.l.b16 %v774
    %v807 = vunpack.c.l.b16 %v775
    %v808 = vunpack.c.l.b16 %v776
    %v809 = vpack.c.b16 %v794, %v793
    %v810 = vpack.c.b16 %v796, %v795
    %v811 = vpack.c.b16 %v798, %v797
    %v812 = vpack.c.b16 %v800, %v799
    %v813 = vpack.c.b16 %v802, %v801
    %v814 = vpack.c.b16 %v804, %v803
    %v815 = vpack.c.b16 %v806, %v805
    %v816 = vpack.c.b16 %v808, %v807
    %825 = vmatprep.subr.bf16.mxu0 0
    %826 = vmatpush1.bf16.msra.mxu0 %v809
    %827 = vmatprep.subr.bf16.mxu0 0
    %828 = vmatpush1.bf16.msra.mxu0 %v810
    %829 = vmatprep.subr.bf16.mxu0 0
    %830 = vmatpush1.bf16.msra.mxu0 %v811
    %831 = vmatprep.subr.bf16.mxu0 0
    %832 = vmatpush1.bf16.msra.mxu0 %v812
    %833 = vmatprep.subr.bf16.mxu0 0
    %834 = vmatpush1.bf16.msra.mxu0 %v813
    %835 = vmatprep.subr.bf16.mxu0 0
    %836 = vmatpush1.bf16.msra.mxu0 %v814
    %837 = vmatprep.subr.bf16.mxu0 0
    %838 = vmatpush1.bf16.msra.mxu0 %v815
    %839 = vmatprep.subr.bf16.mxu0 0
    %840 = vmatpush1.bf16.msra.mxu0 %v816
    %841 = vmatprep.subr.bf16.mxu0 0
    %842 = vmatpush1.bf16.msra.mxu0 0
    %843 = vmatprep.subr.bf16.mxu0 0
    %844 = vmatpush1.bf16.msra.mxu0 0
    %845 = vmatprep.subr.bf16.mxu0 0
    %846 = vmatpush1.bf16.msra.mxu0 0
    %847 = vmatprep.subr.bf16.mxu0 0
    %848 = vmatpush1.bf16.msra.mxu0 0
    %849 = vmatprep.subr.bf16.mxu0 0
    %850 = vmatpush1.bf16.msra.mxu0 0
    %851 = vmatprep.subr.bf16.mxu0 0
    %852 = vmatpush1.bf16.msra.mxu0 0
    %853 = vmatprep.subr.bf16.mxu0 0
    %854 = vmatpush1.bf16.msra.mxu0 0
    %855 = vmatprep.subr.bf16.mxu0 0
    %856 = vmatpush1.bf16.msra.mxu0 0
    %857 = vmatprep.mubr.bf16.mxu0 0
    %858 = vmatmul.mubr.bf16.gmra.mrb[0].mxu0 %v757
    %v859 = vpop.f32.mrb[0].mxu0
    %v860 = vadd.f32 0.0, %v859
    %v861 = vpop.f32.mrb[0].mxu0
    %v862 = vpop.f32.mrb[0].mxu0
    %v863 = vadd.f32 0.0, %v862
    %v864 = vpop.f32.mrb[0].mxu0
    %865 = vmatprep.mubr.bf16.mxu0 0
    %866 = vmatmul.mubr.bf16.gmra.mrb[0].mxu0 %v758
    %v867 = vpop.f32.mrb[0].mxu0
    %v868 = vpop.f32.mrb[0].mxu0
    %v869 = vpop.f32.mrb[0].mxu0
    %v870 = vadd.f32 0.0, %v869
    %v871 = vpop.f32.mrb[0].mxu0
    %872 = vmatprep.mubr.bf16.mxu0 0
    %873 = vmatmul.mubr.bf16.gmra.mrb[0].mxu0 %v759
    %v874 = vpop.f32.mrb[0].mxu0
    %v875 = vadd.f32 0.0, %v874
    %v876 = vpop.f32.mrb[0].mxu0
    %v877 = vpop.f32.mrb[0].mxu0
    %v878 = vpop.f32.mrb[0].mxu0
    %879 = vdwg.mxu0
    %v880 = vadd.f32 %v725, %v860
    %v881 = vadd.f32 %v728, %v863
    %v882 = vadd.f32 %v735, %v870
    %v883 = vadd.f32 %v740, %v875
    %v884 = vlaneseq
    %v885 = vshrl.u32 %v884, 7
    %v886 = vsub.s32 0, %v885
    %v887 = vrot.slane %v485, %v886
    %v888 = vmul.f32 %v880, %v887
    %v889 = vmul.f32 %v881, %v887
    %v890 = vmul.f32 %v882, %v887
    %v891 = vmul.f32 %v883, %v887
    %v892 = vlaneseq
    %v893 = vshrl.u32 %v892, 7
    %v894 = vsub.s32 0, %v893
    %v895 = vrot.slane %v486, %v894
    %v896 = vadd.f32 %v888, %v895
    %v897 = vadd.f32 %v889, %v895
    %v898 = vadd.f32 %v890, %v895
    %v899 = vadd.f32 %v891, %v895
    %v900 = vadd.f32 %v47, %v896
    %v901 = vadd.f32 %v48, %v897
    %v902 = vadd.f32 %v49, %v898
    %v903 = vadd.f32 %v50, %v899
    %v904 = vmax.f32 %v900, 0.0
    %v905 = vmax.f32 %v901, 0.0
    %v906 = vmax.f32 %v902, 0.0
    %v907 = vmax.f32 %v903, 0.0
    %908 = vst [vmem:[#allocation7] sm:$0xff] %v904
    %909 = vst [vmem:[#allocation7 + $0x8] sm:$0xff] %v905
    %910 = vst [vmem:[#allocation7 + $0x10] sm:$0xff] %v906
    %911 = vst [vmem:[#allocation7 + $0x18] sm:$0xff] %v907
    // Predicated region
    $region26: #{tpu_custom_call.1} parent=1 // pred_check
      _
    $region27: #{tpu_custom_call.1} parent=1 // pred_check_branch
      %913 = sbr.rel (0) target = $region29
    $region28: #{tpu_custom_call.1} parent=1 // pred_region
      %s915 = ssub.s32 512, 512
      %916 = vsyncadd [#allocation4], %s915
      %s917 = sshll.u32 [#allocation7], 4
      %s918 = int_to_ptr.vmem [resolvable:$true] %s917
      %923 = dma.vmem_to_hbm [thread:$0]  %s918, 512, %s4, [#allocation4], 128, 128, 8
    $region29: #{tpu_custom_call.1} parent=1 // pred_fallthru
      _
    // Predicated region
    $region30: #{tpu_custom_call.1} parent=1 // pred_check
      _
    $region31: #{tpu_custom_call.1} parent=1 // pred_check_branch
      %925 = sbr.rel (0) target = $region33
    $region32: #{tpu_custom_call.1} parent=1 // pred_region
      %926 = dma.done [#allocation4], 512
    $region33: #{tpu_custom_call.1} parent=1 // pred_fallthru
      _
    %927 = vsyncpa [#allocation3], 1
    %928 = vsyncpa [#allocation6], 1
    %929 = vsyncpa [#allocation4], 1

</llo_original>
